<compile_context>
chip_gen: v5e
topology: v5e:2x2
jax: 0.10.0
libtpu: 0.0.40
codegen_flags: <defaults>
</compile_context>

<pallas_src>
import functools

import jax
import jax.numpy as jnp
import numpy as np
from jax import lax
from jax.experimental import pallas as pl
from jax.experimental.pallas import tpu as pltpu

# --- module hyper-parameters (match MultiPartLoss.__init__ defaults) -------
S, B, C = 7, 2, 20
IMG_W = IMG_H = 448.0
GRID_W = IMG_W / S
GRID_H = IMG_H / S
LAMBDA_COORD = 5.0
LAMBDA_NOOBJ = 0.5
F = B * 5 + C          # 30 features per cell
F_PAD = 32             # padded to a sublane multiple of 8
CELLS = S * S          # 49

LANES = 128            # cells per lane row
CH_ROWS = 8            # sublane rows per inner chunk -> 1024 cells / chunk


def _cdiv(a, b):
    return (a + b - 1) // b


def _round_up(x, n):
    return _cdiv(x, n) * n


def _make_loss_kernel(tile_rows):
    chunks = tile_rows // CH_ROWS
    cells_per_tile = tile_rows * LANES

    def kernel(p_ref, t_ref, out_ref):
        # p_ref/t_ref: (F_PAD, tile_rows, 128) f32 blocks (features x cells)
        # out_ref:     (8, 128) f32 partial sums for this tile
        i = pl.program_id(0)
        base_f = (i * cells_per_tile).astype(jnp.float32)

        sub_iota = lax.broadcasted_iota(jnp.int32, (CH_ROWS, LANES), 0)
        lane_iota = lax.broadcasted_iota(jnp.int32, (CH_ROWS, LANES), 1)

        def chunk_body(c, acc):
            r0 = pl.multiple_of(c * CH_ROWS, CH_ROWS)

            def pf(k):
                return p_ref[k, pl.ds(r0, CH_ROWS), :]

            def tf(k):
                return t_ref[k, pl.ds(r0, CH_ROWS), :]

            # ---- global cell index -> (col, row) of the SxS grid ----------
            # exact while N*S*S (padded) < 2**24; asserted in the wrapper.
            idx = (sub_iota + r0) * LANES + lane_iota
            g = idx.astype(jnp.float32) + base_f
            q = jnp.floor((g + 0.5) * (1.0 / CELLS))
            cell = g - jnp.float32(CELLS) * q          # g mod 49
            row = jnp.floor((cell + 0.5) * (1.0 / S))
            col = cell - jnp.float32(S) * row          # cell mod 7

            # ---- class-probability term + object mask ---------------------
            class_sq = jnp.zeros((CH_ROWS, LANES), jnp.float32)
            t_prob_sum = jnp.zeros((CH_ROWS, LANES), jnp.float32)
            for k in range(C):
                pk = pf(k)
                tk = tf(k)
                d = pk - tk
                class_sq = class_sq + d * d
                t_prob_sum = t_prob_sum + tk
            obj = t_prob_sum > 0.0

            # ---- confidence terms ------------------------------------------
            pc0, pc1 = pf(C), pf(C + 1)
            tc0, tc1 = tf(C), tf(C + 1)
            noobj_term = LAMBDA_NOOBJ * ((pc0 - tc0) ** 2 + (pc1 - tc1) ** 2)

            def boxes(fk, k):
                base = C + B + 4 * k
                return fk(base), fk(base + 1), fk(base + 2), fk(base + 3)

            def iou(pb, tb):
                px, py, pw, ph = pb
                tx, ty, tw, th = tb
                # de-normalize exactly like compute_ious
                px = (px + col) * GRID_W
                tx = (tx + col) * GRID_W
                py = (py + row) * GRID_H
                ty = (ty + row) * GRID_H
                pw = pw * IMG_W
                tw = tw * IMG_W
                ph = ph * IMG_H
                th = th * IMG_H
                xA = jnp.maximum(px - 0.5 * pw, tx - 0.5 * tw)
                yA = jnp.maximum(py - 0.5 * ph, ty - 0.5 * th)
                xB = jnp.minimum(px + 0.5 * pw, tx + 0.5 * tw)
                yB = jnp.minimum(py + 0.5 * ph, ty + 0.5 * th)
                inter = (jnp.maximum(0.0, xB - xA + 1.0) *
                         jnp.maximum(0.0, yB - yA + 1.0))
                # exact division keeps the best-box argmax bit-close to the
                # reference (cross-multiplying risks flips when union <= 0).
                return inter / (pw * ph + tw * th - inter)

            p0 = boxes(pf, 0)
            p1 = boxes(pf, 1)
            t0 = boxes(tf, 0)
            t1 = boxes(tf, 1)
            best1 = iou(p1, t1) > iou(p0, t0)     # ties -> box 0

            def sel(a0, a1):
                return jnp.where(best1, a1, a0)

            top_pc = sel(pc0, pc1)
            top_tc = sel(tc0, tc1)
            px, py, pw, ph = (sel(a, b) for a, b in zip(p0, p1))
            tx, ty, tw, th = (sel(a, b) for a, b in zip(t0, t1))

            conf_term = (1.0 - LAMBDA_NOOBJ) * (top_pc - top_tc) ** 2
            xy_term = LAMBDA_COORD * ((px - tx) ** 2 + (py - ty) ** 2)
            wh_term = LAMBDA_COORD * ((jnp.sqrt(pw) - jnp.sqrt(tw)) ** 2 +
                                      (jnp.sqrt(ph) - jnp.sqrt(th)) ** 2)

            # keep the obj mask as where() (NOT a multiply) so NaNs from sqrt
            # of negative w/h in non-object / zero-padded cells are discarded.
            per_cell = noobj_term + jnp.where(
                obj, class_sq + conf_term + xy_term + wh_term, 0.0)
            return acc + per_cell

        acc0 = jnp.zeros((CH_ROWS, LANES), jnp.float32)
        acc = lax.fori_loop(0, chunks, chunk_body, acc0,
                            unroll=(chunks <= 8))
        out_ref[...] = acc

    return kernel


@functools.partial(jax.jit, static_argnames=("tile_m",))
def multi_part_loss(preds, targets, *, tile_m=16384):
    """preds, targets: (N, S*S, B*5+C) float. Returns scalar f32 loss."""
    n, ss, f = preds.shape
    assert ss == CELLS and f == F
    m = n * ss

    # ---- balanced, chunk-aligned tiling along the cell axis ----------------
    rows = _round_up(_cdiv(m, LANES), CH_ROWS)               # total sublane rows
    max_tile_rows = max(CH_ROWS, (tile_m // LANES) // CH_ROWS * CH_ROWS)
    grid = _cdiv(rows, max_tile_rows)
    tile_rows = _round_up(_cdiv(rows, grid), CH_ROWS)         # balanced tile
    rows_pad = grid * tile_rows
    m_pad = rows_pad * LANES
    # col/row derivation uses exact-in-f32 cell indices
    assert m_pad < (1 << 24), "cell index no longer exact in f32"

    def prep(x):
        # (N, 49, 30) -> (30, M) -> zero-pad to (32, M_pad) -> (32, rows, 128).
        # Padded features / cells have zero targets so they contribute 0.
        x2 = x.reshape(m, f).astype(jnp.float32).T
        x2 = jnp.pad(x2, ((0, F_PAD - f), (0, m_pad - m)))
        return x2.reshape(F_PAD, rows_pad, LANES)

    p3 = prep(preds)
    t3 = prep(targets)

    # VMEM footprint: 2 inputs x 2 pipeline buffers x (32*tile_rows*128*4) B
    #   = 8 MiB at tile_rows=128 (16384 cells); output blocks are 4 KiB each.
    partials = pl.pallas_call(
        _make_loss_kernel(tile_rows),
        out_shape=jax.ShapeDtypeStruct((grid, CH_ROWS, LANES), jnp.float32),
        grid_spec=pltpu.PrefetchScalarGridSpec(
            num_scalar_prefetch=0,
            grid=(grid,),
            in_specs=[
                pl.BlockSpec((F_PAD, tile_rows, LANES), lambda i: (0, i, 0)),
                pl.BlockSpec((F_PAD, tile_rows, LANES), lambda i: (0, i, 0)),
            ],
            out_specs=pl.BlockSpec((None, CH_ROWS, LANES),
                                   lambda i: (i, 0, 0)),
        ),
        compiler_params=pltpu.CompilerParams(
            dimension_semantics=("parallel",),        # independent tiles: both
            vmem_limit_bytes=32 * 1024 * 1024,        # v7x TCs can be used
        ),
    )(p3, t3)

    return jnp.sum(partials) / jnp.float32(n)


# ------------------------- pure-numpy reference -----------------------------
def reference_loss(preds, targets):
    preds = np.asarray(preds, np.float32)
    targets = np.asarray(targets, np.float32)
    N = preds.shape[0]
    pred_probs = preds[:, :, :C].reshape(-1, C)
    pred_conf = preds[:, :, C:C + B].reshape(-1, B)
    pred_bboxs = preds[:, :, C + B:C + 5 * B].reshape(N, S * S, B, 4)
    targ_probs = targets[:, :, :C].reshape(-1, C)
    targ_conf = targets[:, :, C:C + B].reshape(-1, B)
    targ_bboxs = targets[:, :, C + B:C + 5 * B].reshape(N, S * S, B, 4)

    loss = LAMBDA_NOOBJ * np.sum((pred_conf - targ_conf) ** 2)

    pb = pred_bboxs.copy()
    tb = targ_bboxs.copy()
    j = np.arange(S * S)
    col = (j % S).astype(np.float32)[None, :, None]
    row = (j // S).astype(np.float32)[None, :, None]
    pb[..., 0] = (pb[..., 0] + col) * GRID_W
    tb[..., 0] = (tb[..., 0] + col) * GRID_W
    pb[..., 1] = (pb[..., 1] + row) * GRID_H
    tb[..., 1] = (tb[..., 1] + row) * GRID_H
    pb[..., 2] *= IMG_W; tb[..., 2] *= IMG_W
    pb[..., 3] *= IMG_H; tb[..., 3] *= IMG_H
    pbf = pb.reshape(-1, 4); tbf = tb.reshape(-1, 4)
    xA = np.maximum(pbf[:, 0] - pbf[:, 2] / 2, tbf[:, 0] - tbf[:, 2] / 2)
    yA = np.maximum(pbf[:, 1] - pbf[:, 3] / 2, tbf[:, 1] - tbf[:, 3] / 2)
    xB = np.minimum(pbf[:, 0] + pbf[:, 2] / 2, tbf[:, 0] + tbf[:, 2] / 2)
    yB = np.minimum(pbf[:, 1] + pbf[:, 3] / 2, tbf[:, 1] + tbf[:, 3] / 2)
    inter = np.maximum(0.0, xB - xA + 1.0) * np.maximum(0.0, yB - yA + 1.0)
    iou = inter / (pbf[:, 2] * pbf[:, 3] + tbf[:, 2] * tbf[:, 3] - inter)

    top = np.argmax(iou.reshape(-1, B), axis=1)
    r = np.arange(top.shape[0])
    pred_bb = pred_bboxs.reshape(-1, B, 4)[r, top]
    targ_bb = targ_bboxs.reshape(-1, B, 4)[r, top]
    tpc = pred_conf[r, top]
    ttc = targ_conf[r, top]
    obj = np.sum(targ_probs, axis=1) > 0

    loss += (1.0 - LAMBDA_NOOBJ) * np.sum((tpc[obj] - ttc[obj]) ** 2)
    loss += np.sum((pred_probs[obj] - targ_probs[obj]) ** 2)
    loss += LAMBDA_COORD * np.sum((pred_bb[obj, :2] - targ_bb[obj, :2]) ** 2)
    loss += LAMBDA_COORD * np.sum((np.sqrt(pred_bb[obj, 2:]) -
                                   np.sqrt(targ_bb[obj, 2:])) ** 2)
    return loss / N


def _make_inputs(key, n):
    k1, k2, k3 = jax.random.split(key, 3)
    # values in [0, 1) so sqrt(w), sqrt(h) are well defined
    preds = jax.random.uniform(k1, (n, CELLS, F), dtype=jnp.float32)
    targets = jax.random.uniform(k2, (n, CELLS, F), dtype=jnp.float32)
    # only ~30% of grid cells contain an object (zero class probs elsewhere)
    obj_mask = (jax.random.uniform(k3, (n, CELLS, 1)) < 0.3).astype(jnp.float32)
    targets = targets.at[:, :, :C].multiply(obj_mask)
    return preds, targets


if __name__ == "__main__":
    key = jax.random.PRNGKey(0)
    ka, kb = jax.random.split(key)

    # small test (single chunk)
    preds, targets = _make_inputs(ka, 2)
    loss = jax.block_until_ready(multi_part_loss(preds, targets))
    ref = reference_loss(np.asarray(preds), np.asarray(targets))
    np.testing.assert_allclose(np.asarray(loss), ref, rtol=1e-4, atol=1e-3)

    # slightly larger batch to exercise the multi-chunk inner loop
    preds2, targets2 = _make_inputs(kb, 24)
    loss2 = jax.block_until_ready(multi_part_loss(preds2, targets2))
    ref2 = reference_loss(np.asarray(preds2), np.asarray(targets2))
    np.testing.assert_allclose(np.asarray(loss2), ref2, rtol=1e-4, atol=1e-3)

    print("KERNEL_OK")
</pallas_src>

<mosaic_0001>
module attributes {stable_mosaic.version = 11 : i64} {
  func.func @kernel(%arg0: i32, %arg1: memref<32x8x128xf32, #tpu.memory_space<vmem>>, %arg2: memref<32x8x128xf32, #tpu.memory_space<vmem>>, %arg3: memref<1x8x128xf32, #tpu.memory_space<vmem>>) attributes {dimension_semantics = [#tpu.dimension_semantics<parallel>], iteration_bounds = array<i64: 1>, scalar_prefetch = 0 : i64, scratch_operands = 0 : i64, tpu.core_type = #tpu.core_type<tc>, window_params = [{transform_indices = @transform_0, window_bounds = array<i64: 32, 8, 128>}, {transform_indices = @transform_1, window_bounds = array<i64: 32, 8, 128>}, {transform_indices = @transform_2, window_bounds = array<i64: 1, 8, 128>}]} {
    %c1024_i32 = arith.constant 1024 : i32
    %0 = arith.muli %arg0, %c1024_i32 : i32
    %1 = arith.sitofp %0 : i32 to f32
    %2 = tpu.iota {dimensions = array<i32: 0>} : vector<8x128xi32>
    %3 = tpu.iota {dimensions = array<i32: 1>} : vector<8x128xi32>
    %cst = arith.constant 0.000000e+00 : f32
    %4 = vector.broadcast %cst : f32 to vector<8x128xf32>
    %c0_i32 = arith.constant 0 : i32
    %c8_i32 = arith.constant 8 : i32
    %5 = arith.muli %c0_i32, %c8_i32 : i32
    %6 = tpu.assume_multiple %5, 8 : i32
    %7 = vector.broadcast %6 : i32 to vector<8x128xi32>
    %8 = arith.addi %2, %7 : vector<8x128xi32>
    %c128_i32 = arith.constant 128 : i32
    %9 = vector.broadcast %c128_i32 : i32 to vector<8x128xi32>
    %10 = arith.muli %8, %9 : vector<8x128xi32>
    %11 = arith.addi %10, %3 : vector<8x128xi32>
    %12 = arith.sitofp %11 : vector<8x128xi32> to vector<8x128xf32>
    %13 = vector.broadcast %1 : f32 to vector<8x128xf32>
    %14 = arith.addf %12, %13 : vector<8x128xf32>
    %cst_0 = arith.constant 5.000000e-01 : f32
    %15 = vector.broadcast %cst_0 : f32 to vector<8x128xf32>
    %16 = arith.addf %14, %15 : vector<8x128xf32>
    %cst_1 = arith.constant 0.0204081628 : f32
    %17 = vector.broadcast %cst_1 : f32 to vector<8x128xf32>
    %18 = arith.mulf %16, %17 : vector<8x128xf32>
    %19 = math.floor %18 : vector<8x128xf32>
    %cst_2 = arith.constant 4.900000e+01 : f32
    %20 = vector.broadcast %cst_2 : f32 to vector<8x128xf32>
    %21 = arith.mulf %20, %19 : vector<8x128xf32>
    %22 = arith.subf %14, %21 : vector<8x128xf32>
    %cst_3 = arith.constant 5.000000e-01 : f32
    %23 = vector.broadcast %cst_3 : f32 to vector<8x128xf32>
    %24 = arith.addf %22, %23 : vector<8x128xf32>
    %cst_4 = arith.constant 0.142857149 : f32
    %25 = vector.broadcast %cst_4 : f32 to vector<8x128xf32>
    %26 = arith.mulf %24, %25 : vector<8x128xf32>
    %27 = math.floor %26 : vector<8x128xf32>
    %cst_5 = arith.constant 7.000000e+00 : f32
    %28 = vector.broadcast %cst_5 : f32 to vector<8x128xf32>
    %29 = arith.mulf %28, %27 : vector<8x128xf32>
    %30 = arith.subf %22, %29 : vector<8x128xf32>
    %cst_6 = arith.constant 0.000000e+00 : f32
    %31 = vector.broadcast %cst_6 : f32 to vector<8x128xf32>
    %cst_7 = arith.constant 0.000000e+00 : f32
    %32 = vector.broadcast %cst_7 : f32 to vector<8x128xf32>
    %c0 = arith.constant 0 : index
    %33 = arith.index_cast %6 : i32 to index
    %c0_8 = arith.constant 0 : index
    %34 = vector.load %arg1[%c0, %33, %c0_8] : memref<32x8x128xf32, #tpu.memory_space<vmem>>, vector<1x8x128xf32>
    %35 = vector.shape_cast %34 : vector<1x8x128xf32> to vector<8x128xf32>
    %c0_9 = arith.constant 0 : index
    %36 = arith.index_cast %6 : i32 to index
    %c0_10 = arith.constant 0 : index
    %37 = vector.load %arg2[%c0_9, %36, %c0_10] : memref<32x8x128xf32, #tpu.memory_space<vmem>>, vector<1x8x128xf32>
    %38 = vector.shape_cast %37 : vector<1x8x128xf32> to vector<8x128xf32>
    %39 = arith.subf %35, %38 : vector<8x128xf32>
    %40 = arith.mulf %39, %39 : vector<8x128xf32>
    %41 = arith.addf %31, %40 : vector<8x128xf32>
    %42 = arith.addf %32, %38 : vector<8x128xf32>
    %c1 = arith.constant 1 : index
    %43 = arith.index_cast %6 : i32 to index
    %c0_11 = arith.constant 0 : index
    %44 = vector.load %arg1[%c1, %43, %c0_11] : memref<32x8x128xf32, #tpu.memory_space<vmem>>, vector<1x8x128xf32>
    %45 = vector.shape_cast %44 : vector<1x8x128xf32> to vector<8x128xf32>
    %c1_12 = arith.constant 1 : index
    %46 = arith.index_cast %6 : i32 to index
    %c0_13 = arith.constant 0 : index
    %47 = vector.load %arg2[%c1_12, %46, %c0_13] : memref<32x8x128xf32, #tpu.memory_space<vmem>>, vector<1x8x128xf32>
    %48 = vector.shape_cast %47 : vector<1x8x128xf32> to vector<8x128xf32>
    %49 = arith.subf %45, %48 : vector<8x128xf32>
    %50 = arith.mulf %49, %49 : vector<8x128xf32>
    %51 = arith.addf %41, %50 : vector<8x128xf32>
    %52 = arith.addf %42, %48 : vector<8x128xf32>
    %c2 = arith.constant 2 : index
    %53 = arith.index_cast %6 : i32 to index
    %c0_14 = arith.constant 0 : index
    %54 = vector.load %arg1[%c2, %53, %c0_14] : memref<32x8x128xf32, #tpu.memory_space<vmem>>, vector<1x8x128xf32>
    %55 = vector.shape_cast %54 : vector<1x8x128xf32> to vector<8x128xf32>
    %c2_15 = arith.constant 2 : index
    %56 = arith.index_cast %6 : i32 to index
    %c0_16 = arith.constant 0 : index
    %57 = vector.load %arg2[%c2_15, %56, %c0_16] : memref<32x8x128xf32, #tpu.memory_space<vmem>>, vector<1x8x128xf32>
    %58 = vector.shape_cast %57 : vector<1x8x128xf32> to vector<8x128xf32>
    %59 = arith.subf %55, %58 : vector<8x128xf32>
    %60 = arith.mulf %59, %59 : vector<8x128xf32>
    %61 = arith.addf %51, %60 : vector<8x128xf32>
    %62 = arith.addf %52, %58 : vector<8x128xf32>
    %c3 = arith.constant 3 : index
    %63 = arith.index_cast %6 : i32 to index
    %c0_17 = arith.constant 0 : index
    %64 = vector.load %arg1[%c3, %63, %c0_17] : memref<32x8x128xf32, #tpu.memory_space<vmem>>, vector<1x8x128xf32>
    %65 = vector.shape_cast %64 : vector<1x8x128xf32> to vector<8x128xf32>
    %c3_18 = arith.constant 3 : index
    %66 = arith.index_cast %6 : i32 to index
    %c0_19 = arith.constant 0 : index
    %67 = vector.load %arg2[%c3_18, %66, %c0_19] : memref<32x8x128xf32, #tpu.memory_space<vmem>>, vector<1x8x128xf32>
    %68 = vector.shape_cast %67 : vector<1x8x128xf32> to vector<8x128xf32>
    %69 = arith.subf %65, %68 : vector<8x128xf32>
    %70 = arith.mulf %69, %69 : vector<8x128xf32>
    %71 = arith.addf %61, %70 : vector<8x128xf32>
    %72 = arith.addf %62, %68 : vector<8x128xf32>
    %c4 = arith.constant 4 : index
    %73 = arith.index_cast %6 : i32 to index
    %c0_20 = arith.constant 0 : index
    %74 = vector.load %arg1[%c4, %73, %c0_20] : memref<32x8x128xf32, #tpu.memory_space<vmem>>, vector<1x8x128xf32>
    %75 = vector.shape_cast %74 : vector<1x8x128xf32> to vector<8x128xf32>
    %c4_21 = arith.constant 4 : index
    %76 = arith.index_cast %6 : i32 to index
    %c0_22 = arith.constant 0 : index
    %77 = vector.load %arg2[%c4_21, %76, %c0_22] : memref<32x8x128xf32, #tpu.memory_space<vmem>>, vector<1x8x128xf32>
    %78 = vector.shape_cast %77 : vector<1x8x128xf32> to vector<8x128xf32>
    %79 = arith.subf %75, %78 : vector<8x128xf32>
    %80 = arith.mulf %79, %79 : vector<8x128xf32>
    %81 = arith.addf %71, %80 : vector<8x128xf32>
    %82 = arith.addf %72, %78 : vector<8x128xf32>
    %c5 = arith.constant 5 : index
    %83 = arith.index_cast %6 : i32 to index
    %c0_23 = arith.constant 0 : index
    %84 = vector.load %arg1[%c5, %83, %c0_23] : memref<32x8x128xf32, #tpu.memory_space<vmem>>, vector<1x8x128xf32>
    %85 = vector.shape_cast %84 : vector<1x8x128xf32> to vector<8x128xf32>
    %c5_24 = arith.constant 5 : index
    %86 = arith.index_cast %6 : i32 to index
    %c0_25 = arith.constant 0 : index
    %87 = vector.load %arg2[%c5_24, %86, %c0_25] : memref<32x8x128xf32, #tpu.memory_space<vmem>>, vector<1x8x128xf32>
    %88 = vector.shape_cast %87 : vector<1x8x128xf32> to vector<8x128xf32>
    %89 = arith.subf %85, %88 : vector<8x128xf32>
    %90 = arith.mulf %89, %89 : vector<8x128xf32>
    %91 = arith.addf %81, %90 : vector<8x128xf32>
    %92 = arith.addf %82, %88 : vector<8x128xf32>
    %c6 = arith.constant 6 : index
    %93 = arith.index_cast %6 : i32 to index
    %c0_26 = arith.constant 0 : index
    %94 = vector.load %arg1[%c6, %93, %c0_26] : memref<32x8x128xf32, #tpu.memory_space<vmem>>, vector<1x8x128xf32>
    %95 = vector.shape_cast %94 : vector<1x8x128xf32> to vector<8x128xf32>
    %c6_27 = arith.constant 6 : index
    %96 = arith.index_cast %6 : i32 to index
    %c0_28 = arith.constant 0 : index
    %97 = vector.load %arg2[%c6_27, %96, %c0_28] : memref<32x8x128xf32, #tpu.memory_space<vmem>>, vector<1x8x128xf32>
    %98 = vector.shape_cast %97 : vector<1x8x128xf32> to vector<8x128xf32>
    %99 = arith.subf %95, %98 : vector<8x128xf32>
    %100 = arith.mulf %99, %99 : vector<8x128xf32>
    %101 = arith.addf %91, %100 : vector<8x128xf32>
    %102 = arith.addf %92, %98 : vector<8x128xf32>
    %c7 = arith.constant 7 : index
    %103 = arith.index_cast %6 : i32 to index
    %c0_29 = arith.constant 0 : index
    %104 = vector.load %arg1[%c7, %103, %c0_29] : memref<32x8x128xf32, #tpu.memory_space<vmem>>, vector<1x8x128xf32>
    %105 = vector.shape_cast %104 : vector<1x8x128xf32> to vector<8x128xf32>
    %c7_30 = arith.constant 7 : index
    %106 = arith.index_cast %6 : i32 to index
    %c0_31 = arith.constant 0 : index
    %107 = vector.load %arg2[%c7_30, %106, %c0_31] : memref<32x8x128xf32, #tpu.memory_space<vmem>>, vector<1x8x128xf32>
    %108 = vector.shape_cast %107 : vector<1x8x128xf32> to vector<8x128xf32>
    %109 = arith.subf %105, %108 : vector<8x128xf32>
    %110 = arith.mulf %109, %109 : vector<8x128xf32>
    %111 = arith.addf %101, %110 : vector<8x128xf32>
    %112 = arith.addf %102, %108 : vector<8x128xf32>
    %c8 = arith.constant 8 : index
    %113 = arith.index_cast %6 : i32 to index
    %c0_32 = arith.constant 0 : index
    %114 = vector.load %arg1[%c8, %113, %c0_32] : memref<32x8x128xf32, #tpu.memory_space<vmem>>, vector<1x8x128xf32>
    %115 = vector.shape_cast %114 : vector<1x8x128xf32> to vector<8x128xf32>
    %c8_33 = arith.constant 8 : index
    %116 = arith.index_cast %6 : i32 to index
    %c0_34 = arith.constant 0 : index
    %117 = vector.load %arg2[%c8_33, %116, %c0_34] : memref<32x8x128xf32, #tpu.memory_space<vmem>>, vector<1x8x128xf32>
    %118 = vector.shape_cast %117 : vector<1x8x128xf32> to vector<8x128xf32>
    %119 = arith.subf %115, %118 : vector<8x128xf32>
    %120 = arith.mulf %119, %119 : vector<8x128xf32>
    %121 = arith.addf %111, %120 : vector<8x128xf32>
    %122 = arith.addf %112, %118 : vector<8x128xf32>
    %c9 = arith.constant 9 : index
    %123 = arith.index_cast %6 : i32 to index
    %c0_35 = arith.constant 0 : index
    %124 = vector.load %arg1[%c9, %123, %c0_35] : memref<32x8x128xf32, #tpu.memory_space<vmem>>, vector<1x8x128xf32>
    %125 = vector.shape_cast %124 : vector<1x8x128xf32> to vector<8x128xf32>
    %c9_36 = arith.constant 9 : index
    %126 = arith.index_cast %6 : i32 to index
    %c0_37 = arith.constant 0 : index
    %127 = vector.load %arg2[%c9_36, %126, %c0_37] : memref<32x8x128xf32, #tpu.memory_space<vmem>>, vector<1x8x128xf32>
    %128 = vector.shape_cast %127 : vector<1x8x128xf32> to vector<8x128xf32>
    %129 = arith.subf %125, %128 : vector<8x128xf32>
    %130 = arith.mulf %129, %129 : vector<8x128xf32>
    %131 = arith.addf %121, %130 : vector<8x128xf32>
    %132 = arith.addf %122, %128 : vector<8x128xf32>
    %c10 = arith.constant 10 : index
    %133 = arith.index_cast %6 : i32 to index
    %c0_38 = arith.constant 0 : index
    %134 = vector.load %arg1[%c10, %133, %c0_38] : memref<32x8x128xf32, #tpu.memory_space<vmem>>, vector<1x8x128xf32>
    %135 = vector.shape_cast %134 : vector<1x8x128xf32> to vector<8x128xf32>
    %c10_39 = arith.constant 10 : index
    %136 = arith.index_cast %6 : i32 to index
    %c0_40 = arith.constant 0 : index
    %137 = vector.load %arg2[%c10_39, %136, %c0_40] : memref<32x8x128xf32, #tpu.memory_space<vmem>>, vector<1x8x128xf32>
    %138 = vector.shape_cast %137 : vector<1x8x128xf32> to vector<8x128xf32>
    %139 = arith.subf %135, %138 : vector<8x128xf32>
    %140 = arith.mulf %139, %139 : vector<8x128xf32>
    %141 = arith.addf %131, %140 : vector<8x128xf32>
    %142 = arith.addf %132, %138 : vector<8x128xf32>
    %c11 = arith.constant 11 : index
    %143 = arith.index_cast %6 : i32 to index
    %c0_41 = arith.constant 0 : index
    %144 = vector.load %arg1[%c11, %143, %c0_41] : memref<32x8x128xf32, #tpu.memory_space<vmem>>, vector<1x8x128xf32>
    %145 = vector.shape_cast %144 : vector<1x8x128xf32> to vector<8x128xf32>
    %c11_42 = arith.constant 11 : index
    %146 = arith.index_cast %6 : i32 to index
    %c0_43 = arith.constant 0 : index
    %147 = vector.load %arg2[%c11_42, %146, %c0_43] : memref<32x8x128xf32, #tpu.memory_space<vmem>>, vector<1x8x128xf32>
    %148 = vector.shape_cast %147 : vector<1x8x128xf32> to vector<8x128xf32>
    %149 = arith.subf %145, %148 : vector<8x128xf32>
    %150 = arith.mulf %149, %149 : vector<8x128xf32>
    %151 = arith.addf %141, %150 : vector<8x128xf32>
    %152 = arith.addf %142, %148 : vector<8x128xf32>
    %c12 = arith.constant 12 : index
    %153 = arith.index_cast %6 : i32 to index
    %c0_44 = arith.constant 0 : index
    %154 = vector.load %arg1[%c12, %153, %c0_44] : memref<32x8x128xf32, #tpu.memory_space<vmem>>, vector<1x8x128xf32>
    %155 = vector.shape_cast %154 : vector<1x8x128xf32> to vector<8x128xf32>
    %c12_45 = arith.constant 12 : index
    %156 = arith.index_cast %6 : i32 to index
    %c0_46 = arith.constant 0 : index
    %157 = vector.load %arg2[%c12_45, %156, %c0_46] : memref<32x8x128xf32, #tpu.memory_space<vmem>>, vector<1x8x128xf32>
    %158 = vector.shape_cast %157 : vector<1x8x128xf32> to vector<8x128xf32>
    %159 = arith.subf %155, %158 : vector<8x128xf32>
    %160 = arith.mulf %159, %159 : vector<8x128xf32>
    %161 = arith.addf %151, %160 : vector<8x128xf32>
    %162 = arith.addf %152, %158 : vector<8x128xf32>
    %c13 = arith.constant 13 : index
    %163 = arith.index_cast %6 : i32 to index
    %c0_47 = arith.constant 0 : index
    %164 = vector.load %arg1[%c13, %163, %c0_47] : memref<32x8x128xf32, #tpu.memory_space<vmem>>, vector<1x8x128xf32>
    %165 = vector.shape_cast %164 : vector<1x8x128xf32> to vector<8x128xf32>
    %c13_48 = arith.constant 13 : index
    %166 = arith.index_cast %6 : i32 to index
    %c0_49 = arith.constant 0 : index
    %167 = vector.load %arg2[%c13_48, %166, %c0_49] : memref<32x8x128xf32, #tpu.memory_space<vmem>>, vector<1x8x128xf32>
    %168 = vector.shape_cast %167 : vector<1x8x128xf32> to vector<8x128xf32>
    %169 = arith.subf %165, %168 : vector<8x128xf32>
    %170 = arith.mulf %169, %169 : vector<8x128xf32>
    %171 = arith.addf %161, %170 : vector<8x128xf32>
    %172 = arith.addf %162, %168 : vector<8x128xf32>
    %c14 = arith.constant 14 : index
    %173 = arith.index_cast %6 : i32 to index
    %c0_50 = arith.constant 0 : index
    %174 = vector.load %arg1[%c14, %173, %c0_50] : memref<32x8x128xf32, #tpu.memory_space<vmem>>, vector<1x8x128xf32>
    %175 = vector.shape_cast %174 : vector<1x8x128xf32> to vector<8x128xf32>
    %c14_51 = arith.constant 14 : index
    %176 = arith.index_cast %6 : i32 to index
    %c0_52 = arith.constant 0 : index
    %177 = vector.load %arg2[%c14_51, %176, %c0_52] : memref<32x8x128xf32, #tpu.memory_space<vmem>>, vector<1x8x128xf32>
    %178 = vector.shape_cast %177 : vector<1x8x128xf32> to vector<8x128xf32>
    %179 = arith.subf %175, %178 : vector<8x128xf32>
    %180 = arith.mulf %179, %179 : vector<8x128xf32>
    %181 = arith.addf %171, %180 : vector<8x128xf32>
    %182 = arith.addf %172, %178 : vector<8x128xf32>
    %c15 = arith.constant 15 : index
    %183 = arith.index_cast %6 : i32 to index
    %c0_53 = arith.constant 0 : index
    %184 = vector.load %arg1[%c15, %183, %c0_53] : memref<32x8x128xf32, #tpu.memory_space<vmem>>, vector<1x8x128xf32>
    %185 = vector.shape_cast %184 : vector<1x8x128xf32> to vector<8x128xf32>
    %c15_54 = arith.constant 15 : index
    %186 = arith.index_cast %6 : i32 to index
    %c0_55 = arith.constant 0 : index
    %187 = vector.load %arg2[%c15_54, %186, %c0_55] : memref<32x8x128xf32, #tpu.memory_space<vmem>>, vector<1x8x128xf32>
    %188 = vector.shape_cast %187 : vector<1x8x128xf32> to vector<8x128xf32>
    %189 = arith.subf %185, %188 : vector<8x128xf32>
    %190 = arith.mulf %189, %189 : vector<8x128xf32>
    %191 = arith.addf %181, %190 : vector<8x128xf32>
    %192 = arith.addf %182, %188 : vector<8x128xf32>
    %c16 = arith.constant 16 : index
    %193 = arith.index_cast %6 : i32 to index
    %c0_56 = arith.constant 0 : index
    %194 = vector.load %arg1[%c16, %193, %c0_56] : memref<32x8x128xf32, #tpu.memory_space<vmem>>, vector<1x8x128xf32>
    %195 = vector.shape_cast %194 : vector<1x8x128xf32> to vector<8x128xf32>
    %c16_57 = arith.constant 16 : index
    %196 = arith.index_cast %6 : i32 to index
    %c0_58 = arith.constant 0 : index
    %197 = vector.load %arg2[%c16_57, %196, %c0_58] : memref<32x8x128xf32, #tpu.memory_space<vmem>>, vector<1x8x128xf32>
    %198 = vector.shape_cast %197 : vector<1x8x128xf32> to vector<8x128xf32>
    %199 = arith.subf %195, %198 : vector<8x128xf32>
    %200 = arith.mulf %199, %199 : vector<8x128xf32>
    %201 = arith.addf %191, %200 : vector<8x128xf32>
    %202 = arith.addf %192, %198 : vector<8x128xf32>
    %c17 = arith.constant 17 : index
    %203 = arith.index_cast %6 : i32 to index
    %c0_59 = arith.constant 0 : index
    %204 = vector.load %arg1[%c17, %203, %c0_59] : memref<32x8x128xf32, #tpu.memory_space<vmem>>, vector<1x8x128xf32>
    %205 = vector.shape_cast %204 : vector<1x8x128xf32> to vector<8x128xf32>
    %c17_60 = arith.constant 17 : index
    %206 = arith.index_cast %6 : i32 to index
    %c0_61 = arith.constant 0 : index
    %207 = vector.load %arg2[%c17_60, %206, %c0_61] : memref<32x8x128xf32, #tpu.memory_space<vmem>>, vector<1x8x128xf32>
    %208 = vector.shape_cast %207 : vector<1x8x128xf32> to vector<8x128xf32>
    %209 = arith.subf %205, %208 : vector<8x128xf32>
    %210 = arith.mulf %209, %209 : vector<8x128xf32>
    %211 = arith.addf %201, %210 : vector<8x128xf32>
    %212 = arith.addf %202, %208 : vector<8x128xf32>
    %c18 = arith.constant 18 : index
    %213 = arith.index_cast %6 : i32 to index
    %c0_62 = arith.constant 0 : index
    %214 = vector.load %arg1[%c18, %213, %c0_62] : memref<32x8x128xf32, #tpu.memory_space<vmem>>, vector<1x8x128xf32>
    %215 = vector.shape_cast %214 : vector<1x8x128xf32> to vector<8x128xf32>
    %c18_63 = arith.constant 18 : index
    %216 = arith.index_cast %6 : i32 to index
    %c0_64 = arith.constant 0 : index
    %217 = vector.load %arg2[%c18_63, %216, %c0_64] : memref<32x8x128xf32, #tpu.memory_space<vmem>>, vector<1x8x128xf32>
    %218 = vector.shape_cast %217 : vector<1x8x128xf32> to vector<8x128xf32>
    %219 = arith.subf %215, %218 : vector<8x128xf32>
    %220 = arith.mulf %219, %219 : vector<8x128xf32>
    %221 = arith.addf %211, %220 : vector<8x128xf32>
    %222 = arith.addf %212, %218 : vector<8x128xf32>
    %c19 = arith.constant 19 : index
    %223 = arith.index_cast %6 : i32 to index
    %c0_65 = arith.constant 0 : index
    %224 = vector.load %arg1[%c19, %223, %c0_65] : memref<32x8x128xf32, #tpu.memory_space<vmem>>, vector<1x8x128xf32>
    %225 = vector.shape_cast %224 : vector<1x8x128xf32> to vector<8x128xf32>
    %c19_66 = arith.constant 19 : index
    %226 = arith.index_cast %6 : i32 to index
    %c0_67 = arith.constant 0 : index
    %227 = vector.load %arg2[%c19_66, %226, %c0_67] : memref<32x8x128xf32, #tpu.memory_space<vmem>>, vector<1x8x128xf32>
    %228 = vector.shape_cast %227 : vector<1x8x128xf32> to vector<8x128xf32>
    %229 = arith.subf %225, %228 : vector<8x128xf32>
    %230 = arith.mulf %229, %229 : vector<8x128xf32>
    %231 = arith.addf %221, %230 : vector<8x128xf32>
    %232 = arith.addf %222, %228 : vector<8x128xf32>
    %cst_68 = arith.constant 0.000000e+00 : f32
    %233 = vector.broadcast %cst_68 : f32 to vector<8x128xf32>
    %234 = arith.cmpf ogt, %232, %233 : vector<8x128xf32>
    %c20 = arith.constant 20 : index
    %235 = arith.index_cast %6 : i32 to index
    %c0_69 = arith.constant 0 : index
    %236 = vector.load %arg1[%c20, %235, %c0_69] : memref<32x8x128xf32, #tpu.memory_space<vmem>>, vector<1x8x128xf32>
    %237 = vector.shape_cast %236 : vector<1x8x128xf32> to vector<8x128xf32>
    %c21 = arith.constant 21 : index
    %238 = arith.index_cast %6 : i32 to index
    %c0_70 = arith.constant 0 : index
    %239 = vector.load %arg1[%c21, %238, %c0_70] : memref<32x8x128xf32, #tpu.memory_space<vmem>>, vector<1x8x128xf32>
    %240 = vector.shape_cast %239 : vector<1x8x128xf32> to vector<8x128xf32>
    %c20_71 = arith.constant 20 : index
    %241 = arith.index_cast %6 : i32 to index
    %c0_72 = arith.constant 0 : index
    %242 = vector.load %arg2[%c20_71, %241, %c0_72] : memref<32x8x128xf32, #tpu.memory_space<vmem>>, vector<1x8x128xf32>
    %243 = vector.shape_cast %242 : vector<1x8x128xf32> to vector<8x128xf32>
    %c21_73 = arith.constant 21 : index
    %244 = arith.index_cast %6 : i32 to index
    %c0_74 = arith.constant 0 : index
    %245 = vector.load %arg2[%c21_73, %244, %c0_74] : memref<32x8x128xf32, #tpu.memory_space<vmem>>, vector<1x8x128xf32>
    %246 = vector.shape_cast %245 : vector<1x8x128xf32> to vector<8x128xf32>
    %247 = arith.subf %237, %243 : vector<8x128xf32>
    %248 = arith.mulf %247, %247 : vector<8x128xf32>
    %249 = arith.subf %240, %246 : vector<8x128xf32>
    %250 = arith.mulf %249, %249 : vector<8x128xf32>
    %251 = arith.addf %248, %250 : vector<8x128xf32>
    %cst_75 = arith.constant 5.000000e-01 : f32
    %252 = vector.broadcast %cst_75 : f32 to vector<8x128xf32>
    %253 = arith.mulf %252, %251 : vector<8x128xf32>
    %c22 = arith.constant 22 : index
    %254 = arith.index_cast %6 : i32 to index
    %c0_76 = arith.constant 0 : index
    %255 = vector.load %arg1[%c22, %254, %c0_76] : memref<32x8x128xf32, #tpu.memory_space<vmem>>, vector<1x8x128xf32>
    %256 = vector.shape_cast %255 : vector<1x8x128xf32> to vector<8x128xf32>
    %c23 = arith.constant 23 : index
    %257 = arith.index_cast %6 : i32 to index
    %c0_77 = arith.constant 0 : index
    %258 = vector.load %arg1[%c23, %257, %c0_77] : memref<32x8x128xf32, #tpu.memory_space<vmem>>, vector<1x8x128xf32>
    %259 = vector.shape_cast %258 : vector<1x8x128xf32> to vector<8x128xf32>
    %c24 = arith.constant 24 : index
    %260 = arith.index_cast %6 : i32 to index
    %c0_78 = arith.constant 0 : index
    %261 = vector.load %arg1[%c24, %260, %c0_78] : memref<32x8x128xf32, #tpu.memory_space<vmem>>, vector<1x8x128xf32>
    %262 = vector.shape_cast %261 : vector<1x8x128xf32> to vector<8x128xf32>
    %c25 = arith.constant 25 : index
    %263 = arith.index_cast %6 : i32 to index
    %c0_79 = arith.constant 0 : index
    %264 = vector.load %arg1[%c25, %263, %c0_79] : memref<32x8x128xf32, #tpu.memory_space<vmem>>, vector<1x8x128xf32>
    %265 = vector.shape_cast %264 : vector<1x8x128xf32> to vector<8x128xf32>
    %c26 = arith.constant 26 : index
    %266 = arith.index_cast %6 : i32 to index
    %c0_80 = arith.constant 0 : index
    %267 = vector.load %arg1[%c26, %266, %c0_80] : memref<32x8x128xf32, #tpu.memory_space<vmem>>, vector<1x8x128xf32>
    %268 = vector.shape_cast %267 : vector<1x8x128xf32> to vector<8x128xf32>
    %c27 = arith.constant 27 : index
    %269 = arith.index_cast %6 : i32 to index
    %c0_81 = arith.constant 0 : index
    %270 = vector.load %arg1[%c27, %269, %c0_81] : memref<32x8x128xf32, #tpu.memory_space<vmem>>, vector<1x8x128xf32>
    %271 = vector.shape_cast %270 : vector<1x8x128xf32> to vector<8x128xf32>
    %c28 = arith.constant 28 : index
    %272 = arith.index_cast %6 : i32 to index
    %c0_82 = arith.constant 0 : index
    %273 = vector.load %arg1[%c28, %272, %c0_82] : memref<32x8x128xf32, #tpu.memory_space<vmem>>, vector<1x8x128xf32>
    %274 = vector.shape_cast %273 : vector<1x8x128xf32> to vector<8x128xf32>
    %c29 = arith.constant 29 : index
    %275 = arith.index_cast %6 : i32 to index
    %c0_83 = arith.constant 0 : index
    %276 = vector.load %arg1[%c29, %275, %c0_83] : memref<32x8x128xf32, #tpu.memory_space<vmem>>, vector<1x8x128xf32>
    %277 = vector.shape_cast %276 : vector<1x8x128xf32> to vector<8x128xf32>
    %c22_84 = arith.constant 22 : index
    %278 = arith.index_cast %6 : i32 to index
    %c0_85 = arith.constant 0 : index
    %279 = vector.load %arg2[%c22_84, %278, %c0_85] : memref<32x8x128xf32, #tpu.memory_space<vmem>>, vector<1x8x128xf32>
    %280 = vector.shape_cast %279 : vector<1x8x128xf32> to vector<8x128xf32>
    %c23_86 = arith.constant 23 : index
    %281 = arith.index_cast %6 : i32 to index
    %c0_87 = arith.constant 0 : index
    %282 = vector.load %arg2[%c23_86, %281, %c0_87] : memref<32x8x128xf32, #tpu.memory_space<vmem>>, vector<1x8x128xf32>
    %283 = vector.shape_cast %282 : vector<1x8x128xf32> to vector<8x128xf32>
    %c24_88 = arith.constant 24 : index
    %284 = arith.index_cast %6 : i32 to index
    %c0_89 = arith.constant 0 : index
    %285 = vector.load %arg2[%c24_88, %284, %c0_89] : memref<32x8x128xf32, #tpu.memory_space<vmem>>, vector<1x8x128xf32>
    %286 = vector.shape_cast %285 : vector<1x8x128xf32> to vector<8x128xf32>
    %c25_90 = arith.constant 25 : index
    %287 = arith.index_cast %6 : i32 to index
    %c0_91 = arith.constant 0 : index
    %288 = vector.load %arg2[%c25_90, %287, %c0_91] : memref<32x8x128xf32, #tpu.memory_space<vmem>>, vector<1x8x128xf32>
    %289 = vector.shape_cast %288 : vector<1x8x128xf32> to vector<8x128xf32>
    %c26_92 = arith.constant 26 : index
    %290 = arith.index_cast %6 : i32 to index
    %c0_93 = arith.constant 0 : index
    %291 = vector.load %arg2[%c26_92, %290, %c0_93] : memref<32x8x128xf32, #tpu.memory_space<vmem>>, vector<1x8x128xf32>
    %292 = vector.shape_cast %291 : vector<1x8x128xf32> to vector<8x128xf32>
    %c27_94 = arith.constant 27 : index
    %293 = arith.index_cast %6 : i32 to index
    %c0_95 = arith.constant 0 : index
    %294 = vector.load %arg2[%c27_94, %293, %c0_95] : memref<32x8x128xf32, #tpu.memory_space<vmem>>, vector<1x8x128xf32>
    %295 = vector.shape_cast %294 : vector<1x8x128xf32> to vector<8x128xf32>
    %c28_96 = arith.constant 28 : index
    %296 = arith.index_cast %6 : i32 to index
    %c0_97 = arith.constant 0 : index
    %297 = vector.load %arg2[%c28_96, %296, %c0_97] : memref<32x8x128xf32, #tpu.memory_space<vmem>>, vector<1x8x128xf32>
    %298 = vector.shape_cast %297 : vector<1x8x128xf32> to vector<8x128xf32>
    %c29_98 = arith.constant 29 : index
    %299 = arith.index_cast %6 : i32 to index
    %c0_99 = arith.constant 0 : index
    %300 = vector.load %arg2[%c29_98, %299, %c0_99] : memref<32x8x128xf32, #tpu.memory_space<vmem>>, vector<1x8x128xf32>
    %301 = vector.shape_cast %300 : vector<1x8x128xf32> to vector<8x128xf32>
    %302 = arith.addf %268, %30 : vector<8x128xf32>
    %cst_100 = arith.constant 6.400000e+01 : f32
    %303 = vector.broadcast %cst_100 : f32 to vector<8x128xf32>
    %304 = arith.mulf %302, %303 : vector<8x128xf32>
    %305 = arith.addf %292, %30 : vector<8x128xf32>
    %cst_101 = arith.constant 6.400000e+01 : f32
    %306 = vector.broadcast %cst_101 : f32 to vector<8x128xf32>
    %307 = arith.mulf %305, %306 : vector<8x128xf32>
    %308 = arith.addf %271, %27 : vector<8x128xf32>
    %cst_102 = arith.constant 6.400000e+01 : f32
    %309 = vector.broadcast %cst_102 : f32 to vector<8x128xf32>
    %310 = arith.mulf %308, %309 : vector<8x128xf32>
    %311 = arith.addf %295, %27 : vector<8x128xf32>
    %cst_103 = arith.constant 6.400000e+01 : f32
    %312 = vector.broadcast %cst_103 : f32 to vector<8x128xf32>
    %313 = arith.mulf %311, %312 : vector<8x128xf32>
    %cst_104 = arith.constant 4.480000e+02 : f32
    %314 = vector.broadcast %cst_104 : f32 to vector<8x128xf32>
    %315 = arith.mulf %274, %314 : vector<8x128xf32>
    %cst_105 = arith.constant 4.480000e+02 : f32
    %316 = vector.broadcast %cst_105 : f32 to vector<8x128xf32>
    %317 = arith.mulf %298, %316 : vector<8x128xf32>
    %cst_106 = arith.constant 4.480000e+02 : f32
    %318 = vector.broadcast %cst_106 : f32 to vector<8x128xf32>
    %319 = arith.mulf %277, %318 : vector<8x128xf32>
    %cst_107 = arith.constant 4.480000e+02 : f32
    %320 = vector.broadcast %cst_107 : f32 to vector<8x128xf32>
    %321 = arith.mulf %301, %320 : vector<8x128xf32>
    %cst_108 = arith.constant 5.000000e-01 : f32
    %322 = vector.broadcast %cst_108 : f32 to vector<8x128xf32>
    %323 = arith.mulf %322, %315 : vector<8x128xf32>
    %324 = arith.subf %304, %323 : vector<8x128xf32>
    %cst_109 = arith.constant 5.000000e-01 : f32
    %325 = vector.broadcast %cst_109 : f32 to vector<8x128xf32>
    %326 = arith.mulf %325, %317 : vector<8x128xf32>
    %327 = arith.subf %307, %326 : vector<8x128xf32>
    %328 = arith.maximumf %324, %327 : vector<8x128xf32>
    %cst_110 = arith.constant 5.000000e-01 : f32
    %329 = vector.broadcast %cst_110 : f32 to vector<8x128xf32>
    %330 = arith.mulf %329, %319 : vector<8x128xf32>
    %331 = arith.subf %310, %330 : vector<8x128xf32>
    %cst_111 = arith.constant 5.000000e-01 : f32
    %332 = vector.broadcast %cst_111 : f32 to vector<8x128xf32>
    %333 = arith.mulf %332, %321 : vector<8x128xf32>
    %334 = arith.subf %313, %333 : vector<8x128xf32>
    %335 = arith.maximumf %331, %334 : vector<8x128xf32>
    %cst_112 = arith.constant 5.000000e-01 : f32
    %336 = vector.broadcast %cst_112 : f32 to vector<8x128xf32>
    %337 = arith.mulf %336, %315 : vector<8x128xf32>
    %338 = arith.addf %304, %337 : vector<8x128xf32>
    %cst_113 = arith.constant 5.000000e-01 : f32
    %339 = vector.broadcast %cst_113 : f32 to vector<8x128xf32>
    %340 = arith.mulf %339, %317 : vector<8x128xf32>
    %341 = arith.addf %307, %340 : vector<8x128xf32>
    %342 = arith.minimumf %338, %341 : vector<8x128xf32>
    %cst_114 = arith.constant 5.000000e-01 : f32
    %343 = vector.broadcast %cst_114 : f32 to vector<8x128xf32>
    %344 = arith.mulf %343, %319 : vector<8x128xf32>
    %345 = arith.addf %310, %344 : vector<8x128xf32>
    %cst_115 = arith.constant 5.000000e-01 : f32
    %346 = vector.broadcast %cst_115 : f32 to vector<8x128xf32>
    %347 = arith.mulf %346, %321 : vector<8x128xf32>
    %348 = arith.addf %313, %347 : vector<8x128xf32>
    %349 = arith.minimumf %345, %348 : vector<8x128xf32>
    %350 = arith.subf %342, %328 : vector<8x128xf32>
    %cst_116 = arith.constant 1.000000e+00 : f32
    %351 = vector.broadcast %cst_116 : f32 to vector<8x128xf32>
    %352 = arith.addf %350, %351 : vector<8x128xf32>
    %cst_117 = arith.constant 0.000000e+00 : f32
    %353 = vector.broadcast %cst_117 : f32 to vector<8x128xf32>
    %354 = arith.maximumf %353, %352 : vector<8x128xf32>
    %355 = arith.subf %349, %335 : vector<8x128xf32>
    %cst_118 = arith.constant 1.000000e+00 : f32
    %356 = vector.broadcast %cst_118 : f32 to vector<8x128xf32>
    %357 = arith.addf %355, %356 : vector<8x128xf32>
    %cst_119 = arith.constant 0.000000e+00 : f32
    %358 = vector.broadcast %cst_119 : f32 to vector<8x128xf32>
    %359 = arith.maximumf %358, %357 : vector<8x128xf32>
    %360 = arith.mulf %354, %359 : vector<8x128xf32>
    %361 = arith.mulf %315, %319 : vector<8x128xf32>
    %362 = arith.mulf %317, %321 : vector<8x128xf32>
    %363 = arith.addf %361, %362 : vector<8x128xf32>
    %364 = arith.subf %363, %360 : vector<8x128xf32>
    %365 = arith.divf %360, %364 : vector<8x128xf32>
    %366 = arith.addf %256, %30 : vector<8x128xf32>
    %cst_120 = arith.constant 6.400000e+01 : f32
    %367 = vector.broadcast %cst_120 : f32 to vector<8x128xf32>
    %368 = arith.mulf %366, %367 : vector<8x128xf32>
    %369 = arith.addf %280, %30 : vector<8x128xf32>
    %cst_121 = arith.constant 6.400000e+01 : f32
    %370 = vector.broadcast %cst_121 : f32 to vector<8x128xf32>
    %371 = arith.mulf %369, %370 : vector<8x128xf32>
    %372 = arith.addf %259, %27 : vector<8x128xf32>
    %cst_122 = arith.constant 6.400000e+01 : f32
    %373 = vector.broadcast %cst_122 : f32 to vector<8x128xf32>
    %374 = arith.mulf %372, %373 : vector<8x128xf32>
    %375 = arith.addf %283, %27 : vector<8x128xf32>
    %cst_123 = arith.constant 6.400000e+01 : f32
    %376 = vector.broadcast %cst_123 : f32 to vector<8x128xf32>
    %377 = arith.mulf %375, %376 : vector<8x128xf32>
    %cst_124 = arith.constant 4.480000e+02 : f32
    %378 = vector.broadcast %cst_124 : f32 to vector<8x128xf32>
    %379 = arith.mulf %262, %378 : vector<8x128xf32>
    %cst_125 = arith.constant 4.480000e+02 : f32
    %380 = vector.broadcast %cst_125 : f32 to vector<8x128xf32>
    %381 = arith.mulf %286, %380 : vector<8x128xf32>
    %cst_126 = arith.constant 4.480000e+02 : f32
    %382 = vector.broadcast %cst_126 : f32 to vector<8x128xf32>
    %383 = arith.mulf %265, %382 : vector<8x128xf32>
    %cst_127 = arith.constant 4.480000e+02 : f32
    %384 = vector.broadcast %cst_127 : f32 to vector<8x128xf32>
    %385 = arith.mulf %289, %384 : vector<8x128xf32>
    %cst_128 = arith.constant 5.000000e-01 : f32
    %386 = vector.broadcast %cst_128 : f32 to vector<8x128xf32>
    %387 = arith.mulf %386, %379 : vector<8x128xf32>
    %388 = arith.subf %368, %387 : vector<8x128xf32>
    %cst_129 = arith.constant 5.000000e-01 : f32
    %389 = vector.broadcast %cst_129 : f32 to vector<8x128xf32>
    %390 = arith.mulf %389, %381 : vector<8x128xf32>
    %391 = arith.subf %371, %390 : vector<8x128xf32>
    %392 = arith.maximumf %388, %391 : vector<8x128xf32>
    %cst_130 = arith.constant 5.000000e-01 : f32
    %393 = vector.broadcast %cst_130 : f32 to vector<8x128xf32>
    %394 = arith.mulf %393, %383 : vector<8x128xf32>
    %395 = arith.subf %374, %394 : vector<8x128xf32>
    %cst_131 = arith.constant 5.000000e-01 : f32
    %396 = vector.broadcast %cst_131 : f32 to vector<8x128xf32>
    %397 = arith.mulf %396, %385 : vector<8x128xf32>
    %398 = arith.subf %377, %397 : vector<8x128xf32>
    %399 = arith.maximumf %395, %398 : vector<8x128xf32>
    %cst_132 = arith.constant 5.000000e-01 : f32
    %400 = vector.broadcast %cst_132 : f32 to vector<8x128xf32>
    %401 = arith.mulf %400, %379 : vector<8x128xf32>
    %402 = arith.addf %368, %401 : vector<8x128xf32>
    %cst_133 = arith.constant 5.000000e-01 : f32
    %403 = vector.broadcast %cst_133 : f32 to vector<8x128xf32>
    %404 = arith.mulf %403, %381 : vector<8x128xf32>
    %405 = arith.addf %371, %404 : vector<8x128xf32>
    %406 = arith.minimumf %402, %405 : vector<8x128xf32>
    %cst_134 = arith.constant 5.000000e-01 : f32
    %407 = vector.broadcast %cst_134 : f32 to vector<8x128xf32>
    %408 = arith.mulf %407, %383 : vector<8x128xf32>
    %409 = arith.addf %374, %408 : vector<8x128xf32>
    %cst_135 = arith.constant 5.000000e-01 : f32
    %410 = vector.broadcast %cst_135 : f32 to vector<8x128xf32>
    %411 = arith.mulf %410, %385 : vector<8x128xf32>
    %412 = arith.addf %377, %411 : vector<8x128xf32>
    %413 = arith.minimumf %409, %412 : vector<8x128xf32>
    %414 = arith.subf %406, %392 : vector<8x128xf32>
    %cst_136 = arith.constant 1.000000e+00 : f32
    %415 = vector.broadcast %cst_136 : f32 to vector<8x128xf32>
    %416 = arith.addf %414, %415 : vector<8x128xf32>
    %cst_137 = arith.constant 0.000000e+00 : f32
    %417 = vector.broadcast %cst_137 : f32 to vector<8x128xf32>
    %418 = arith.maximumf %417, %416 : vector<8x128xf32>
    %419 = arith.subf %413, %399 : vector<8x128xf32>
    %cst_138 = arith.constant 1.000000e+00 : f32
    %420 = vector.broadcast %cst_138 : f32 to vector<8x128xf32>
    %421 = arith.addf %419, %420 : vector<8x128xf32>
    %cst_139 = arith.constant 0.000000e+00 : f32
    %422 = vector.broadcast %cst_139 : f32 to vector<8x128xf32>
    %423 = arith.maximumf %422, %421 : vector<8x128xf32>
    %424 = arith.mulf %418, %423 : vector<8x128xf32>
    %425 = arith.mulf %379, %383 : vector<8x128xf32>
    %426 = arith.mulf %381, %385 : vector<8x128xf32>
    %427 = arith.addf %425, %426 : vector<8x128xf32>
    %428 = arith.subf %427, %424 : vector<8x128xf32>
    %429 = arith.divf %424, %428 : vector<8x128xf32>
    %430 = arith.cmpf ogt, %365, %429 : vector<8x128xf32>
    %431 = arith.select %430, %240, %237 : vector<8x128xi1>, vector<8x128xf32>
    %432 = arith.select %430, %246, %243 : vector<8x128xi1>, vector<8x128xf32>
    %433 = arith.select %430, %268, %256 : vector<8x128xi1>, vector<8x128xf32>
    %434 = arith.select %430, %271, %259 : vector<8x128xi1>, vector<8x128xf32>
    %435 = arith.select %430, %274, %262 : vector<8x128xi1>, vector<8x128xf32>
    %436 = arith.select %430, %277, %265 : vector<8x128xi1>, vector<8x128xf32>
    %437 = arith.select %430, %292, %280 : vector<8x128xi1>, vector<8x128xf32>
    %438 = arith.select %430, %295, %283 : vector<8x128xi1>, vector<8x128xf32>
    %439 = arith.select %430, %298, %286 : vector<8x128xi1>, vector<8x128xf32>
    %440 = arith.select %430, %301, %289 : vector<8x128xi1>, vector<8x128xf32>
    %441 = arith.subf %431, %432 : vector<8x128xf32>
    %442 = arith.mulf %441, %441 : vector<8x128xf32>
    %cst_140 = arith.constant 5.000000e-01 : f32
    %443 = vector.broadcast %cst_140 : f32 to vector<8x128xf32>
    %444 = arith.mulf %443, %442 : vector<8x128xf32>
    %445 = arith.subf %433, %437 : vector<8x128xf32>
    %446 = arith.mulf %445, %445 : vector<8x128xf32>
    %447 = arith.subf %434, %438 : vector<8x128xf32>
    %448 = arith.mulf %447, %447 : vector<8x128xf32>
    %449 = arith.addf %446, %448 : vector<8x128xf32>
    %cst_141 = arith.constant 5.000000e+00 : f32
    %450 = vector.broadcast %cst_141 : f32 to vector<8x128xf32>
    %451 = arith.mulf %450, %449 : vector<8x128xf32>
    %452 = math.sqrt %435 : vector<8x128xf32>
    %453 = math.sqrt %439 : vector<8x128xf32>
    %454 = arith.subf %452, %453 : vector<8x128xf32>
    %455 = arith.mulf %454, %454 : vector<8x128xf32>
    %456 = math.sqrt %436 : vector<8x128xf32>
    %457 = math.sqrt %440 : vector<8x128xf32>
    %458 = arith.subf %456, %457 : vector<8x128xf32>
    %459 = arith.mulf %458, %458 : vector<8x128xf32>
    %460 = arith.addf %455, %459 : vector<8x128xf32>
    %cst_142 = arith.constant 5.000000e+00 : f32
    %461 = vector.broadcast %cst_142 : f32 to vector<8x128xf32>
    %462 = arith.mulf %461, %460 : vector<8x128xf32>
    %463 = arith.addf %231, %444 : vector<8x128xf32>
    %464 = arith.addf %463, %451 : vector<8x128xf32>
    %465 = arith.addf %464, %462 : vector<8x128xf32>
    %cst_143 = arith.constant 0.000000e+00 : f32
    %466 = vector.broadcast %cst_143 : f32 to vector<8x128xf32>
    %467 = arith.select %234, %465, %466 : vector<8x128xi1>, vector<8x128xf32>
    %468 = arith.addf %253, %467 : vector<8x128xf32>
    %469 = arith.addf %4, %468 : vector<8x128xf32>
    %c1_i32 = arith.constant 1 : i32
    %c0_144 = arith.constant 0 : index
    %c0_145 = arith.constant 0 : index
    %c0_146 = arith.constant 0 : index
    %470 = vector.load %arg3[%c0_144, %c0_145, %c0_146] : memref<1x8x128xf32, #tpu.memory_space<vmem>>, vector<1x8x128xf32>
    %471 = vector.shape_cast %470 : vector<1x8x128xf32> to vector<8x128xf32>
    %472 = vector.shape_cast %469 : vector<8x128xf32> to vector<1x8x128xf32>
    tpu.vector_store %arg3[%c0_144, %c0_145, %c0_146], %472 {strides = array<i32>} : memref<1x8x128xf32, #tpu.memory_space<vmem>>, vector<1x8x128xf32>,
    return
  }
  func.func @transform_0(%arg0: i32) -> (i32, i32, i32) {
    %c0_i32 = arith.constant 0 : i32
    %c0_i32_0 = arith.constant 0 : i32
    %c0_i32_1 = arith.constant 0 : i32
    return %c0_i32, %arg0, %c0_i32_0 : i32, i32, i32
  }
  func.func @transform_1(%arg0: i32) -> (i32, i32, i32) {
    %c0_i32 = arith.constant 0 : i32
    %c0_i32_0 = arith.constant 0 : i32
    %c0_i32_1 = arith.constant 0 : i32
    return %c0_i32, %arg0, %c0_i32_0 : i32, i32, i32
  }
  func.func @transform_2(%arg0: i32) -> (i32, i32, i32) {
    %c0_i32 = arith.constant 0 : i32
    %c0_i32_0 = arith.constant 0 : i32
    %c0_i32_1 = arith.constant 0 : i32
    return %arg0, %c0_i32, %c0_i32_0 : i32, i32, i32
  }
}

</mosaic_0001>

<llo_original>
// kernel: multi_part_loss.1
$region0: #{multi_part_loss.1}
  #allocation0 [shape = 'u32[]', space=smem, size = 0x4, offset = 0x4, fixed_abs, tag = 'smem constant byte address 0x4 - core index']
  #allocation1 [shape = 'u32[72,128]{1,0:T(1,128)}', space=vmem, size = 0x9000, scoped, tag = 'internal scratch']
  %s0 = inlined_call_operand.vmem [shape: f32[32,8,128], index: 0, kind: input, shape index: {}]
  %s1 = inlined_call_operand.vmem [shape: f32[32,8,128], index: 1, kind: input, shape index: {}]
  %s2 = inlined_call_operand.vmem [shape: f32[1,8,128], index: 2, kind: output, shape index: {}]
  %s3 = sld [smem:[#allocation0]]
  $region18: #{multi_part_loss.1} parent=0
    _
  %s5 = ssub.s32 1, %s3
  %s6 = scalar_select 0, %s5, %s3
  // Predicated region
  $region2: #{multi_part_loss.1} parent=0 // pred_check
    _
  $region3: #{multi_part_loss.1} parent=0 // pred_check_branch
    %8 = sbr.rel (0) target = $region5
  $region4: #{multi_part_loss.1} parent=0 // pred_region
    _
  $region5: #{multi_part_loss.1} parent=0 // pred_fallthru
    _
  // Predicated region
  $region6: #{multi_part_loss.1} parent=0 // pred_check
    _
  $region7: #{multi_part_loss.1} parent=0 // pred_check_branch
    %10 = sbr.rel (0) target = $region9
  $region8: #{multi_part_loss.1} parent=0 // pred_region
    _
  $region9: #{multi_part_loss.1} parent=0 // pred_fallthru
    _
  %s11 = smul.u32 0, 1024
  %s12 = scvt.s32.f32 %s11
  %v13 = vlaneseq
  %v14 = vshrl.u32 %v13, 7
  %v15 = vlaneseq
  %v16 = vand.u32 %v15, 127
  %v17 = vstv 0
  %v18 = vadd.s32 %v14, %v17
  %v19 = vmul.u32 %v18, 128
  %v20 = vadd.s32 %v19, %v16
  %v21 = vcvt.s32.f32 %v20
  %v22 = vstv %s12
  %v23 = vadd.f32 %v21, %v22
  %v24 = vadd.f32 %v23, 0.5
  %v25 = vmul.f32 %v24, 0.020408163
  %v26 = vfloor.f32 %v25
  %v27 = vmul.f32 %v26, 49.0
  %v28 = vsub.f32 %v23, %v27
  %v29 = vadd.f32 %v28, 0.5
  %v30 = vmul.f32 %v29, 0.14285715
  %v31 = vfloor.f32 %v30
  %v32 = vmul.f32 %v31, 7.0
  %v33 = vsub.f32 %v28, %v32
  %v34 = vld [vmem:[%s0] sm:$0xff]
  %v35 = vld [vmem:[%s1] sm:$0xff]
  %v36 = vsub.f32 %v34, %v35
  %v37 = vmul.f32 %v36, %v36
  %v38 = vadd.f32 %v37, 0.0
  %v39 = vadd.f32 %v35, 0.0
  %s40 = sadd.s32 0, 8
  %s41 = scalar_lea.vmem %s0, %s40
  %v42 = vld [vmem:[%s41] sm:$0xff]
  %s43 = scalar_lea.vmem %s1, %s40
  %v44 = vld [vmem:[%s43] sm:$0xff]
  %v45 = vsub.f32 %v42, %v44
  %v46 = vmul.f32 %v45, %v45
  %v47 = vadd.f32 %v38, %v46
  %v48 = vadd.f32 %v39, %v44
  %s49 = sadd.s32 0, 16
  %s50 = scalar_lea.vmem %s0, %s49
  %v51 = vld [vmem:[%s50] sm:$0xff]
  %s52 = scalar_lea.vmem %s1, %s49
  %v53 = vld [vmem:[%s52] sm:$0xff]
  %v54 = vsub.f32 %v51, %v53
  %v55 = vmul.f32 %v54, %v54
  %v56 = vadd.f32 %v47, %v55
  %v57 = vadd.f32 %v48, %v53
  %s58 = sadd.s32 0, 24
  %s59 = scalar_lea.vmem %s0, %s58
  %v60 = vld [vmem:[%s59] sm:$0xff]
  %s61 = scalar_lea.vmem %s1, %s58
  %v62 = vld [vmem:[%s61] sm:$0xff]
  %v63 = vsub.f32 %v60, %v62
  %v64 = vmul.f32 %v63, %v63
  %v65 = vadd.f32 %v56, %v64
  %v66 = vadd.f32 %v57, %v62
  %s67 = sadd.s32 0, 32
  %s68 = scalar_lea.vmem %s0, %s67
  %v69 = vld [vmem:[%s68] sm:$0xff]
  %s70 = scalar_lea.vmem %s1, %s67
  %v71 = vld [vmem:[%s70] sm:$0xff]
  %v72 = vsub.f32 %v69, %v71
  %v73 = vmul.f32 %v72, %v72
  %v74 = vadd.f32 %v65, %v73
  %v75 = vadd.f32 %v66, %v71
  %s76 = sadd.s32 0, 40
  %s77 = scalar_lea.vmem %s0, %s76
  %v78 = vld [vmem:[%s77] sm:$0xff]
  %s79 = scalar_lea.vmem %s1, %s76
  %v80 = vld [vmem:[%s79] sm:$0xff]
  %v81 = vsub.f32 %v78, %v80
  %v82 = vmul.f32 %v81, %v81
  %v83 = vadd.f32 %v74, %v82
  %v84 = vadd.f32 %v75, %v80
  %s85 = sadd.s32 0, 48
  %s86 = scalar_lea.vmem %s0, %s85
  %v87 = vld [vmem:[%s86] sm:$0xff]
  %s88 = scalar_lea.vmem %s1, %s85
  %v89 = vld [vmem:[%s88] sm:$0xff]
  %v90 = vsub.f32 %v87, %v89
  %v91 = vmul.f32 %v90, %v90
  %v92 = vadd.f32 %v83, %v91
  %v93 = vadd.f32 %v84, %v89
  %s94 = sadd.s32 0, 56
  %s95 = scalar_lea.vmem %s0, %s94
  %v96 = vld [vmem:[%s95] sm:$0xff]
  %s97 = scalar_lea.vmem %s1, %s94
  %v98 = vld [vmem:[%s97] sm:$0xff]
  %v99 = vsub.f32 %v96, %v98
  %v100 = vmul.f32 %v99, %v99
  %v101 = vadd.f32 %v92, %v100
  %v102 = vadd.f32 %v93, %v98
  %s103 = sadd.s32 0, 64
  %s104 = scalar_lea.vmem %s0, %s103
  %v105 = vld [vmem:[%s104] sm:$0xff]
  %s106 = scalar_lea.vmem %s1, %s103
  %v107 = vld [vmem:[%s106] sm:$0xff]
  %v108 = vsub.f32 %v105, %v107
  %v109 = vmul.f32 %v108, %v108
  %v110 = vadd.f32 %v101, %v109
  %v111 = vadd.f32 %v102, %v107
  %s112 = sadd.s32 0, 72
  %s113 = scalar_lea.vmem %s0, %s112
  %v114 = vld [vmem:[%s113] sm:$0xff]
  %s115 = scalar_lea.vmem %s1, %s112
  %v116 = vld [vmem:[%s115] sm:$0xff]
  %v117 = vsub.f32 %v114, %v116
  %v118 = vmul.f32 %v117, %v117
  %v119 = vadd.f32 %v110, %v118
  %v120 = vadd.f32 %v111, %v116
  %s121 = sadd.s32 0, 80
  %s122 = scalar_lea.vmem %s0, %s121
  %v123 = vld [vmem:[%s122] sm:$0xff]
  %s124 = scalar_lea.vmem %s1, %s121
  %v125 = vld [vmem:[%s124] sm:$0xff]
  %v126 = vsub.f32 %v123, %v125
  %v127 = vmul.f32 %v126, %v126
  %v128 = vadd.f32 %v119, %v127
  %v129 = vadd.f32 %v120, %v125
  %s130 = sadd.s32 0, 88
  %s131 = scalar_lea.vmem %s0, %s130
  %v132 = vld [vmem:[%s131] sm:$0xff]
  %s133 = scalar_lea.vmem %s1, %s130
  %v134 = vld [vmem:[%s133] sm:$0xff]
  %v135 = vsub.f32 %v132, %v134
  %v136 = vmul.f32 %v135, %v135
  %v137 = vadd.f32 %v128, %v136
  %v138 = vadd.f32 %v129, %v134
  %s139 = sadd.s32 0, 96
  %s140 = scalar_lea.vmem %s0, %s139
  %v141 = vld [vmem:[%s140] sm:$0xff]
  %s142 = scalar_lea.vmem %s1, %s139
  %v143 = vld [vmem:[%s142] sm:$0xff]
  %v144 = vsub.f32 %v141, %v143
  %v145 = vmul.f32 %v144, %v144
  %v146 = vadd.f32 %v137, %v145
  %v147 = vadd.f32 %v138, %v143
  %s148 = sadd.s32 0, 104
  %s149 = scalar_lea.vmem %s0, %s148
  %v150 = vld [vmem:[%s149] sm:$0xff]
  %s151 = scalar_lea.vmem %s1, %s148
  %v152 = vld [vmem:[%s151] sm:$0xff]
  %v153 = vsub.f32 %v150, %v152
  %v154 = vmul.f32 %v153, %v153
  %v155 = vadd.f32 %v146, %v154
  %v156 = vadd.f32 %v147, %v152
  %s157 = sadd.s32 0, 112
  %s158 = scalar_lea.vmem %s0, %s157
  %v159 = vld [vmem:[%s158] sm:$0xff]
  %s160 = scalar_lea.vmem %s1, %s157
  %v161 = vld [vmem:[%s160] sm:$0xff]
  %v162 = vsub.f32 %v159, %v161
  %v163 = vmul.f32 %v162, %v162
  %v164 = vadd.f32 %v155, %v163
  %v165 = vadd.f32 %v156, %v161
  %s166 = sadd.s32 0, 120
  %s167 = scalar_lea.vmem %s0, %s166
  %v168 = vld [vmem:[%s167] sm:$0xff]
  %s169 = scalar_lea.vmem %s1, %s166
  %v170 = vld [vmem:[%s169] sm:$0xff]
  %v171 = vsub.f32 %v168, %v170
  %v172 = vmul.f32 %v171, %v171
  %v173 = vadd.f32 %v164, %v172
  %v174 = vadd.f32 %v165, %v170
  %s175 = sadd.s32 0, 128
  %s176 = scalar_lea.vmem %s0, %s175
  %v177 = vld [vmem:[%s176] sm:$0xff]
  %s178 = scalar_lea.vmem %s1, %s175
  %v179 = vld [vmem:[%s178] sm:$0xff]
  %v180 = vsub.f32 %v177, %v179
  %v181 = vmul.f32 %v180, %v180
  %v182 = vadd.f32 %v173, %v181
  %v183 = vadd.f32 %v174, %v179
  %s184 = sadd.s32 0, 136
  %s185 = scalar_lea.vmem %s0, %s184
  %v186 = vld [vmem:[%s185] sm:$0xff]
  %s187 = scalar_lea.vmem %s1, %s184
  %v188 = vld [vmem:[%s187] sm:$0xff]
  %v189 = vsub.f32 %v186, %v188
  %v190 = vmul.f32 %v189, %v189
  %v191 = vadd.f32 %v182, %v190
  %v192 = vadd.f32 %v183, %v188
  %s193 = sadd.s32 0, 144
  %s194 = scalar_lea.vmem %s0, %s193
  %v195 = vld [vmem:[%s194] sm:$0xff]
  %s196 = scalar_lea.vmem %s1, %s193
  %v197 = vld [vmem:[%s196] sm:$0xff]
  %v198 = vsub.f32 %v195, %v197
  %v199 = vmul.f32 %v198, %v198
  %v200 = vadd.f32 %v191, %v199
  %v201 = vadd.f32 %v192, %v197
  %s202 = sadd.s32 0, 152
  %s203 = scalar_lea.vmem %s0, %s202
  %v204 = vld [vmem:[%s203] sm:$0xff]
  %s205 = scalar_lea.vmem %s1, %s202
  %v206 = vld [vmem:[%s205] sm:$0xff]
  %v207 = vsub.f32 %v204, %v206
  %v208 = vmul.f32 %v207, %v207
  %v209 = vadd.f32 %v200, %v208
  %v210 = vadd.f32 %v201, %v206
  %vm211 = vcmp.gt.f32.partialorder %v210, 0.0
  %s212 = sadd.s32 0, 160
  %s213 = scalar_lea.vmem %s0, %s212
  %v214 = vld [vmem:[%s213] sm:$0xff]
  %s215 = sadd.s32 0, 168
  %s216 = scalar_lea.vmem %s0, %s215
  %v217 = vld [vmem:[%s216] sm:$0xff]
  %s218 = scalar_lea.vmem %s1, %s212
  %v219 = vld [vmem:[%s218] sm:$0xff]
  %s220 = scalar_lea.vmem %s1, %s215
  %v221 = vld [vmem:[%s220] sm:$0xff]
  %v222 = vsub.f32 %v214, %v219
  %v223 = vmul.f32 %v222, %v222
  %v224 = vsub.f32 %v217, %v221
  %v225 = vmul.f32 %v224, %v224
  %v226 = vadd.f32 %v223, %v225
  %v227 = vmul.f32 %v226, 0.5
  %s228 = sadd.s32 0, 176
  %s229 = scalar_lea.vmem %s0, %s228
  %v230 = vld [vmem:[%s229] sm:$0xff]
  %s231 = sadd.s32 0, 184
  %s232 = scalar_lea.vmem %s0, %s231
  %v233 = vld [vmem:[%s232] sm:$0xff]
  %s234 = sadd.s32 0, 192
  %s235 = scalar_lea.vmem %s0, %s234
  %v236 = vld [vmem:[%s235] sm:$0xff]
  %s237 = sadd.s32 0, 200
  %s238 = scalar_lea.vmem %s0, %s237
  %v239 = vld [vmem:[%s238] sm:$0xff]
  %s240 = sadd.s32 0, 208
  %s241 = scalar_lea.vmem %s0, %s240
  %v242 = vld [vmem:[%s241] sm:$0xff]
  %s243 = sadd.s32 0, 216
  %s244 = scalar_lea.vmem %s0, %s243
  %v245 = vld [vmem:[%s244] sm:$0xff]
  %s246 = sadd.s32 0, 224
  %s247 = scalar_lea.vmem %s0, %s246
  %v248 = vld [vmem:[%s247] sm:$0xff]
  %s249 = sadd.s32 0, 232
  %s250 = scalar_lea.vmem %s0, %s249
  %v251 = vld [vmem:[%s250] sm:$0xff]
  %s252 = scalar_lea.vmem %s1, %s228
  %v253 = vld [vmem:[%s252] sm:$0xff]
  %s254 = scalar_lea.vmem %s1, %s231
  %v255 = vld [vmem:[%s254] sm:$0xff]
  %s256 = scalar_lea.vmem %s1, %s234
  %v257 = vld [vmem:[%s256] sm:$0xff]
  %s258 = scalar_lea.vmem %s1, %s237
  %v259 = vld [vmem:[%s258] sm:$0xff]
  %s260 = scalar_lea.vmem %s1, %s240
  %v261 = vld [vmem:[%s260] sm:$0xff]
  %s262 = scalar_lea.vmem %s1, %s243
  %v263 = vld [vmem:[%s262] sm:$0xff]
  %s264 = scalar_lea.vmem %s1, %s246
  %v265 = vld [vmem:[%s264] sm:$0xff]
  %s266 = scalar_lea.vmem %s1, %s249
  %v267 = vld [vmem:[%s266] sm:$0xff]
  %v268 = vadd.f32 %v242, %v33
  %v269 = vmul.f32 %v268, 64.0
  %v270 = vadd.f32 %v261, %v33
  %v271 = vmul.f32 %v270, 64.0
  %v272 = vadd.f32 %v245, %v31
  %v273 = vmul.f32 %v272, 64.0
  %v274 = vadd.f32 %v263, %v31
  %v275 = vmul.f32 %v274, 64.0
  %v276 = vmul.f32 %v248, 448.0
  %v277 = vmul.f32 %v265, 448.0
  %v278 = vmul.f32 %v251, 448.0
  %v279 = vmul.f32 %v267, 448.0
  %v280 = vmul.f32 %v276, 0.5
  %v281 = vsub.f32 %v269, %v280
  %v282 = vmul.f32 %v277, 0.5
  %v283 = vsub.f32 %v271, %v282
  %v284 = vmax.f32 %v281, %v283
  %v285 = vmul.f32 %v278, 0.5
  %v286 = vsub.f32 %v273, %v285
  %v287 = vmul.f32 %v279, 0.5
  %v288 = vsub.f32 %v275, %v287
  %v289 = vmax.f32 %v286, %v288
  %v290 = vadd.f32 %v269, %v280
  %v291 = vadd.f32 %v271, %v282
  %v292 = vmin.f32 %v290, %v291
  %v293 = vadd.f32 %v273, %v285
  %v294 = vadd.f32 %v275, %v287
  %v295 = vmin.f32 %v293, %v294
  %v296 = vsub.f32 %v292, %v284
  %v297 = vadd.f32 %v296, 1.0
  %v298 = vmax.f32 %v297, 0.0
  %v299 = vsub.f32 %v295, %v289
  %v300 = vadd.f32 %v299, 1.0
  %v301 = vmax.f32 %v300, 0.0
  %v302 = vmul.f32 %v298, %v301
  %v303 = vmul.f32 %v276, %v278
  %v304 = vmul.f32 %v277, %v279
  %v305 = vadd.f32 %v303, %v304
  %v306 = vsub.f32 %v305, %v302
  %v307 = vrcp.pop %v306
  %v308 = vmul.f32 %v306, %v307
  %v309 = vsub.f32 1.0, %v308
  %v310 = vmul.f32 %v307, %v309
  %v311 = vadd.f32 %v307, %v310
  %vm312 = vweird.f32 %v306
  %vm313 = vweird.f32 %v307
  %vm314 = vmor %vm312, %vm313
  %v315 = vsel %vm314, %v307, %v311
  %v316 = vand.u32 2147483647, %v306
  %vm317 = vcmp.eq.f32.partialorder %v316, 8.507059e+37
  %v318 = vand.u32 %v306, 2147483648
  %v319 = vor.u32 1.1754944e-38, %v318
  %v320 = vsel %vm317, %v319, %v315
  %v321 = vmul.f32 %v302, %v320
  %v322 = vadd.f32 %v230, %v33
  %v323 = vmul.f32 %v322, 64.0
  %v324 = vadd.f32 %v253, %v33
  %v325 = vmul.f32 %v324, 64.0
  %v326 = vadd.f32 %v233, %v31
  %v327 = vmul.f32 %v326, 64.0
  %v328 = vadd.f32 %v255, %v31
  %v329 = vmul.f32 %v328, 64.0
  %v330 = vmul.f32 %v236, 448.0
  %v331 = vmul.f32 %v257, 448.0
  %v332 = vmul.f32 %v239, 448.0
  %v333 = vmul.f32 %v259, 448.0
  %v334 = vmul.f32 %v330, 0.5
  %v335 = vsub.f32 %v323, %v334
  %v336 = vmul.f32 %v331, 0.5
  %v337 = vsub.f32 %v325, %v336
  %v338 = vmax.f32 %v335, %v337
  %v339 = vmul.f32 %v332, 0.5
  %v340 = vsub.f32 %v327, %v339
  %v341 = vmul.f32 %v333, 0.5
  %v342 = vsub.f32 %v329, %v341
  %v343 = vmax.f32 %v340, %v342
  %v344 = vadd.f32 %v323, %v334
  %v345 = vadd.f32 %v325, %v336
  %v346 = vmin.f32 %v344, %v345
  %v347 = vadd.f32 %v327, %v339
  %v348 = vadd.f32 %v329, %v341
  %v349 = vmin.f32 %v347, %v348
  %v350 = vsub.f32 %v346, %v338
  %v351 = vadd.f32 %v350, 1.0
  %v352 = vmax.f32 %v351, 0.0
  %v353 = vsub.f32 %v349, %v343
  %v354 = vadd.f32 %v353, 1.0
  %v355 = vmax.f32 %v354, 0.0
  %v356 = vmul.f32 %v352, %v355
  %v357 = vmul.f32 %v330, %v332
  %v358 = vmul.f32 %v331, %v333
  %v359 = vadd.f32 %v357, %v358
  %v360 = vsub.f32 %v359, %v356
  %v361 = vrcp.pop %v360
  %v362 = vmul.f32 %v360, %v361
  %v363 = vsub.f32 1.0, %v362
  %v364 = vmul.f32 %v361, %v363
  %v365 = vadd.f32 %v361, %v364
  %vm366 = vweird.f32 %v360
  %vm367 = vweird.f32 %v361
  %vm368 = vmor %vm366, %vm367
  %v369 = vsel %vm368, %v361, %v365
  %v370 = vand.u32 2147483647, %v360
  %vm371 = vcmp.eq.f32.partialorder %v370, 8.507059e+37
  %v372 = vand.u32 %v360, 2147483648
  %v373 = vor.u32 1.1754944e-38, %v372
  %v374 = vsel %vm371, %v373, %v369
  %v375 = vmul.f32 %v356, %v374
  %vm376 = vcmp.gt.f32.partialorder %v321, %v375
  %v377 = vsel %vm376, %v217, %v214
  %v378 = vsel %vm376, %v221, %v219
  %v379 = vsel %vm376, %v242, %v230
  %v380 = vsel %vm376, %v245, %v233
  %v381 = vsel %vm376, %v248, %v236
  %v382 = vsel %vm376, %v251, %v239
  %v383 = vsel %vm376, %v261, %v253
  %v384 = vsel %vm376, %v263, %v255
  %v385 = vsel %vm376, %v265, %v257
  %v386 = vsel %vm376, %v267, %v259
  %v387 = vsub.f32 %v377, %v378
  %v388 = vmul.f32 %v387, %v387
  %v389 = vmul.f32 %v388, 0.5
  %v390 = vsub.f32 %v379, %v383
  %v391 = vmul.f32 %v390, %v390
  %v392 = vsub.f32 %v380, %v384
  %v393 = vmul.f32 %v392, %v392
  %v394 = vadd.f32 %v391, %v393
  %v395 = vmul.f32 %v394, 5.0
  %v396 = vrsqrt.pop %v381
  %v397 = vmul.f32 %v396, %v381
  %v398 = vmul.f32 %v397, %v396
  %v399 = vmul.f32 0.5, %v398
  %v400 = vsub.f32 1.5, %v399
  %v401 = vmul.f32 %v396, %v400
  %v402 = vmul.f32 %v381, %v401
  %vm403 = vcmp.eq.f32.partialorder %v381, inf
  %v404 = vsel %vm403, %v381, %v402
  %vm405 = vcmp.eq.f32.partialorder %v381, 0.0
  %v406 = vand.u32 %v381, 2147483648
  %v407 = vsel %vm405, %v406, %v404
  %v408 = vrsqrt.pop %v385
  %v409 = vmul.f32 %v408, %v385
  %v410 = vmul.f32 %v409, %v408
  %v411 = vmul.f32 0.5, %v410
  %v412 = vsub.f32 1.5, %v411
  %v413 = vmul.f32 %v408, %v412
  %v414 = vmul.f32 %v385, %v413
  %vm415 = vcmp.eq.f32.partialorder %v385, inf
  %v416 = vsel %vm415, %v385, %v414
  %vm417 = vcmp.eq.f32.partialorder %v385, 0.0
  %v418 = vand.u32 %v385, 2147483648
  %v419 = vsel %vm417, %v418, %v416
  %v420 = vsub.f32 %v407, %v419
  %v421 = vmul.f32 %v420, %v420
  %v422 = vrsqrt.pop %v382
  %v423 = vmul.f32 %v422, %v382
  %v424 = vmul.f32 %v423, %v422
  %v425 = vmul.f32 0.5, %v424
  %v426 = vsub.f32 1.5, %v425
  %v427 = vmul.f32 %v422, %v426
  %v428 = vmul.f32 %v382, %v427
  %vm429 = vcmp.eq.f32.partialorder %v382, inf
  %v430 = vsel %vm429, %v382, %v428
  %vm431 = vcmp.eq.f32.partialorder %v382, 0.0
  %v432 = vand.u32 %v382, 2147483648
  %v433 = vsel %vm431, %v432, %v430
  %v434 = vrsqrt.pop %v386
  %v435 = vmul.f32 %v434, %v386
  %v436 = vmul.f32 %v435, %v434
  %v437 = vmul.f32 0.5, %v436
  %v438 = vsub.f32 1.5, %v437
  %v439 = vmul.f32 %v434, %v438
  %v440 = vmul.f32 %v386, %v439
  %vm441 = vcmp.eq.f32.partialorder %v386, inf
  %v442 = vsel %vm441, %v386, %v440
  %vm443 = vcmp.eq.f32.partialorder %v386, 0.0
  %v444 = vand.u32 %v386, 2147483648
  %v445 = vsel %vm443, %v444, %v442
  %v446 = vsub.f32 %v433, %v445
  %v447 = vmul.f32 %v446, %v446
  %v448 = vadd.f32 %v421, %v447
  %v449 = vmul.f32 %v448, 5.0
  %v450 = vadd.f32 %v209, %v389
  %v451 = vadd.f32 %v450, %v395
  %v452 = vadd.f32 %v451, %v449
  %v453 = vsel %vm211, %v452, 0.0
  %v454 = vadd.f32 %v227, %v453
  %v455 = vadd.f32 %v454, 0.0
  %456 = vst [vmem:[%s2] sm:$0xff] %v455
  // Predicated region
  $region10: #{multi_part_loss.1} parent=0 // pred_check
    _
  $region11: #{multi_part_loss.1} parent=0 // pred_check_branch
    %458 = sbr.rel (0) target = $region13
  $region12: #{multi_part_loss.1} parent=0 // pred_region
    _
  $region13: #{multi_part_loss.1} parent=0 // pred_fallthru
    _
  // Predicated region
  $region14: #{multi_part_loss.1} parent=0 // pred_check
    _
  $region15: #{multi_part_loss.1} parent=0 // pred_check_branch
    %460 = sbr.rel (0) target = $region17
  $region16: #{multi_part_loss.1} parent=0 // pred_region
    _
  $region17: #{multi_part_loss.1} parent=0 // pred_fallthru
    _

</llo_original>
